<compile_context>
chip_gen: v7x
topology: tpu7x:2x2x1
jax: 0.10.0
libtpu: 0.0.40
codegen_flags: <defaults>
</compile_context>

<pallas_src>
import functools

import jax
import jax.numpy as jnp
from jax.experimental import pallas as pl
from jax.experimental.pallas import tpu as pltpu

LANE = 128        # TPU lane width
SUBLANE_F32 = 8   # f32 sublane tile


def _round_up(n, m):
    return ((n + m - 1) // m) * m


def _lstm_model_kernel(x_ref,      # (T*B_pad, D+1)  bf16  (ones col appended)
                       wih_ref,    # (D+1, G)        bf16  (bias row appended)
                       whh_ref,    # (H, G)          bf16
                       w1_ref,     # (H, F_pad)      bf16
                       b1_ref,     # (1, F_pad)      f32
                       w2_ref,     # (F_pad, O_pad)  bf16
                       b2_ref,     # (1, O_pad)      f32  (padded lanes = -1e30)
                       out_ref,    # (B_pad, O_pad)  f32
                       xw_ref,     # (T*B_pad, G)    f32  VMEM scratch
                       *, T, B_pad, H, G):
    # (1) Hoisted input projection for all timesteps, bias fused via the ones
    #     column / bias row.  Staged in VMEM so only one (B_pad, G) slice is
    #     live per unrolled step.
    xw_ref[...] = jnp.dot(x_ref[...], wih_ref[...],
                          preferred_element_type=jnp.float32)

    h = jnp.zeros((B_pad, H), jnp.float32)
    c = jnp.zeros((B_pad, H), jnp.float32)

    # (2) Fully unrolled recurrence (T small and static).  Packed gate layout:
    #     lanes [0:H)=i, [H:2H)=f, [2H:3H)=g, [3H:4H)=o.
    # TODO(synk): for the last bit of serial-chain latency, drive the MXU
    # explicitly (pltpu.matmul_push_rhs once before the loop + matmul_acc_lhs /
    # matmul_pop per step) so W_hh stays resident; verify in the bundle dump
    # whether Mosaic already hoists the loop-invariant weight push first.
    # TODO(synk): if T grows beyond ~16, switch to lax.fori_loop(unroll=2..4).
    for t in range(T):
        gates = xw_ref[pl.ds(t * B_pad, B_pad), :] + jnp.dot(
            h.astype(jnp.bfloat16), whh_ref[...],
            preferred_element_type=jnp.float32)               # (B_pad, G) f32
        # Two full-vreg EUP pushes cover all four gates; slice out sub-blocks.
        sig = jax.nn.sigmoid(gates)
        th = jnp.tanh(gates)
        i_g = sig[:, 0 * H:1 * H]
        f_g = sig[:, 1 * H:2 * H]
        g_g = th[:, 2 * H:3 * H]
        o_g = sig[:, 3 * H:4 * H]
        c = f_g * c + i_g * g_g
        # Note: h is re-quantized to bf16 each step at the MXU boundary; fine
        # at T=8 / H=32 (re-validate tolerance for long sequences).
        h = o_g * jnp.tanh(c)

    # fc1 + ReLU (bf16 MXU operands, f32 accumulate, lane-dense 128-wide)
    z1 = jnp.dot(h.astype(jnp.bfloat16), w1_ref[...],
                 preferred_element_type=jnp.float32) + b1_ref[...]
    z1 = jnp.maximum(z1, 0.0)
    # fc2 (real logits in the first O lanes; padded lanes carry b2 = -1e30)
    logits = jnp.dot(z1.astype(jnp.bfloat16), w2_ref[...],
                     preferred_element_type=jnp.float32) + b2_ref[...]

    # softmax: padded lanes were pre-poisoned via b2, no in-kernel mask needed.
    m = jnp.max(logits, axis=1, keepdims=True)
    e = jnp.exp(logits - m)
    denom = jnp.sum(e, axis=1, keepdims=True)
    # approx reciprocal (EUP slot); use exact divide if probs feed a loss.
    out_ref[...] = e * pl.reciprocal(denom, approx=True)


@jax.jit
def lstm_model_forward(x, params):
    """x: (B, T, D) batch_first, like the PyTorch module. Returns (B, O)."""
    B, T, D = x.shape
    H = params["weight_hh"].shape[1]
    F = params["fc1_w"].shape[0]
    O = params["fc2_w"].shape[0]

    B_pad = _round_up(B, SUBLANE_F32)
    G = _round_up(4 * H, LANE)          # packed gate width (i|f|g|o)
    F_pad = _round_up(F, LANE)
    O_pad = _round_up(O, LANE)

    # Activations: (B,T,D) -> (T, B_pad, D) -> (T*B_pad, D+1) with a fused
    # ones column for the bias, bf16 for the MXU.
    x_tbd = jnp.transpose(x, (1, 0, 2)).astype(jnp.float32)
    x_tbd = jnp.pad(x_tbd, ((0, 0), (0, B_pad - B), (0, 0)))
    x_flat = x_tbd.reshape(T * B_pad, D)
    ones = jnp.ones((T * B_pad, 1), jnp.float32)
    x_flat = jnp.concatenate([x_flat, ones], axis=1).astype(jnp.bfloat16)

    # W_ih: (4H, D) -> (D, 4H) packed, pad cols to G, append combined-bias row.
    wih_t = jnp.pad(params["weight_ih"].T, ((0, 0), (0, G - 4 * H)))
    bias = jnp.pad(params["bias_ih"] + params["bias_hh"], (0, G - 4 * H))[None, :]
    wih_t = jnp.concatenate([wih_t, bias], axis=0).astype(jnp.bfloat16)  # (D+1, G)

    # W_hh: (4H, H) -> (H, 4H) packed, pad cols to G.
    whh_t = jnp.pad(params["weight_hh"].T,
                    ((0, 0), (0, G - 4 * H))).astype(jnp.bfloat16)       # (H, G)

    # FC weights: bf16, zero-padded to lane-dense 128-wide blocks.
    w1_t = jnp.pad(params["fc1_w"].T,
                   ((0, 0), (0, F_pad - F))).astype(jnp.bfloat16)        # (H, F_pad)
    b1 = jnp.pad(params["fc1_b"], (0, F_pad - F))[None, :].astype(jnp.float32)
    w2_t = jnp.pad(params["fc2_w"].T,
                   ((0, F_pad - F), (0, O_pad - O))).astype(jnp.bfloat16)  # (F_pad, O_pad)
    # Bake the softmax lane mask into b2: padded output lanes -> -1e30.
    b2 = jnp.concatenate(
        [params["fc2_b"].astype(jnp.float32),
         jnp.full((O_pad - O,), -1e30, jnp.float32)])[None, :]

    kernel = functools.partial(_lstm_model_kernel,
                               T=T, B_pad=B_pad, H=H, G=G)
    vmem = pl.BlockSpec(memory_space=pltpu.MemorySpace.VMEM)
    out_pad = pl.pallas_call(
        kernel,
        out_shape=jax.ShapeDtypeStruct((B_pad, O_pad), jnp.float32),
        in_specs=[vmem] * 7,
        out_specs=vmem,
        scratch_shapes=[pltpu.VMEM((T * B_pad, G), jnp.float32)],
    )(x_flat, wih_t, whh_t, w1_t, b1, w2_t, b2)
    # Slice padded rows / lanes back inside the same jit (no extra copies).
    return out_pad[:B, :O]
    # TODO(synk): for large B on v7x, add a 'parallel' grid axis over B blocks
    # (weights' index_map constant so they stay resident), compute xw per batch
    # block instead of materializing the full hoisted xw, and set
    # vmem_limit_bytes explicitly; unnecessary at these toy shapes.


def init_params(key, input_size, hidden_size, output_size):
    """Deterministic synthetic parameters matching nn.LSTM / nn.Linear shapes."""
    ks = jax.random.split(key, 8)
    H, D, O = hidden_size, input_size, output_size
    return {
        "weight_ih": jax.random.normal(ks[0], (4 * H, D), jnp.float32) * 0.1,
        "weight_hh": jax.random.normal(ks[1], (4 * H, H), jnp.float32) * 0.1,
        "bias_ih":   jax.random.normal(ks[2], (4 * H,),  jnp.float32) * 0.1,
        "bias_hh":   jax.random.normal(ks[3], (4 * H,),  jnp.float32) * 0.1,
        "fc1_w":     jax.random.normal(ks[4], (10, H),   jnp.float32) * 0.1,
        "fc1_b":     jax.random.normal(ks[5], (10,),     jnp.float32) * 0.1,
        "fc2_w":     jax.random.normal(ks[6], (O, 10),   jnp.float32) * 0.1,
        "fc2_b":     jax.random.normal(ks[7], (O,),      jnp.float32) * 0.1,
    }


def reference_forward(x, params):
    """Pure-JAX f32 reference matching the PyTorch module semantics."""
    B, T, D = x.shape
    H = params["weight_hh"].shape[1]
    wih, whh = params["weight_ih"], params["weight_hh"]
    b = params["bias_ih"] + params["bias_hh"]
    h = jnp.zeros((B, H), jnp.float32)
    c = jnp.zeros((B, H), jnp.float32)
    for t in range(T):
        gates = x[:, t, :] @ wih.T + h @ whh.T + b
        i = jax.nn.sigmoid(gates[:, 0 * H:1 * H])
        f = jax.nn.sigmoid(gates[:, 1 * H:2 * H])
        g = jnp.tanh(gates[:, 2 * H:3 * H])
        o = jax.nn.sigmoid(gates[:, 3 * H:4 * H])
        c = f * c + i * g
        h = o * jnp.tanh(c)
    z1 = jnp.maximum(h @ params["fc1_w"].T + params["fc1_b"], 0.0)
    logits = z1 @ params["fc2_w"].T + params["fc2_b"]
    return jax.nn.softmax(logits, axis=1)


if __name__ == "__main__":
    # Small shapes consistent with the module: batch=2, seq=8, input=4,
    # hidden=32, output=5.
    B, T, D, H, O = 2, 8, 4, 32, 5
    key = jax.random.PRNGKey(0)
    k_x, k_p = jax.random.split(key)
    x = jax.random.normal(k_x, (B, T, D), jnp.float32)
    params = init_params(k_p, D, H, O)

    out = lstm_model_forward(x, params)
    out = jax.block_until_ready(out)
    ref = reference_forward(x, params)

    assert out.shape == (B, O)
    assert bool(jnp.all(jnp.isfinite(out)))
    # softmax rows should sum to ~1 (approx reciprocal -> loose tolerance)
    assert bool(jnp.allclose(jnp.sum(out, axis=1), 1.0, atol=1e-2))
    # match the f32 reference (bf16 MXU operands + approx reciprocal tolerance)
    assert bool(jnp.max(jnp.abs(out - ref)) < 2e-2)
    print("KERNEL_OK")
</pallas_src>

<mosaic_0001>
module attributes {stable_mosaic.version = 11 : i64} {
  func.func @_lstm_model_kernel(%arg0: memref<64x5xbf16, #tpu.memory_space<vmem>>, %arg1: memref<5x128xbf16, #tpu.memory_space<vmem>>, %arg2: memref<32x128xbf16, #tpu.memory_space<vmem>>, %arg3: memref<32x128xbf16, #tpu.memory_space<vmem>>, %arg4: memref<1x128xf32, #tpu.memory_space<vmem>>, %arg5: memref<128x128xbf16, #tpu.memory_space<vmem>>, %arg6: memref<1x128xf32, #tpu.memory_space<vmem>>, %arg7: memref<8x128xf32, #tpu.memory_space<vmem>>, %arg8: memref<64x128xf32, #tpu.memory_space<vmem>>) attributes {dimension_semantics = [], scalar_prefetch = 0 : i64, scratch_operands = 1 : i64, tpu.core_type = #tpu.core_type<tc>} {
    %c0 = arith.constant 0 : index
    %c0_0 = arith.constant 0 : index
    %0 = vector.load %arg0[%c0, %c0_0] : memref<64x5xbf16, #tpu.memory_space<vmem>>, vector<64x5xbf16>
    %c0_1 = arith.constant 0 : index
    %c0_2 = arith.constant 0 : index
    %1 = vector.load %arg1[%c0_1, %c0_2] : memref<5x128xbf16, #tpu.memory_space<vmem>>, vector<5x128xbf16>
    %cst = arith.constant dense<0.000000e+00> : vector<64x128xf32>
    %2 = tpu.matmul %0, %1, %cst {dimension_numbers = #tpu.dot_dimension_numbers<[1], [0], [0], [1], [0, 0, 1, 1], [], []>} : vector<64x5xbf16>, vector<5x128xbf16>, vector<64x128xf32> -> vector<64x128xf32>
    %c0_3 = arith.constant 0 : index
    %c0_4 = arith.constant 0 : index
    %3 = vector.load %arg8[%c0_3, %c0_4] : memref<64x128xf32, #tpu.memory_space<vmem>>, vector<64x128xf32>
    tpu.vector_store %arg8[%c0_3, %c0_4], %2 {strides = array<i32>} : memref<64x128xf32, #tpu.memory_space<vmem>>, vector<64x128xf32>,
    %cst_5 = arith.constant 0.000000e+00 : f32
    %4 = vector.broadcast %cst_5 : f32 to vector<8x32xf32>
    %cst_6 = arith.constant 0.000000e+00 : f32
    %5 = vector.broadcast %cst_6 : f32 to vector<8x32xf32>
    %c0_7 = arith.constant 0 : index
    %c0_8 = arith.constant 0 : index
    %6 = vector.load %arg8[%c0_7, %c0_8] : memref<64x128xf32, #tpu.memory_space<vmem>>, vector<8x128xf32>
    %7 = arith.truncf %4 : vector<8x32xf32> to vector<8x32xbf16>
    %c0_9 = arith.constant 0 : index
    %c0_10 = arith.constant 0 : index
    %8 = vector.load %arg2[%c0_9, %c0_10] : memref<32x128xbf16, #tpu.memory_space<vmem>>, vector<32x128xbf16>
    %cst_11 = arith.constant dense<0.000000e+00> : vector<8x128xf32>
    %9 = tpu.matmul %7, %8, %cst_11 {dimension_numbers = #tpu.dot_dimension_numbers<[1], [0], [0], [1], [0, 0, 1, 1], [], []>} : vector<8x32xbf16>, vector<32x128xbf16>, vector<8x128xf32> -> vector<8x128xf32>
    %10 = arith.addf %6, %9 : vector<8x128xf32>
    %11 = arith.negf %10 : vector<8x128xf32>
    %12 = math.exp %11 : vector<8x128xf32>
    %cst_12 = arith.constant 1.000000e+00 : f32
    %13 = vector.broadcast %cst_12 : f32 to vector<8x128xf32>
    %14 = arith.addf %13, %12 : vector<8x128xf32>
    %15 = arith.divf %13, %14 : vector<8x128xf32>
    %16 = math.tanh %10 : vector<8x128xf32>
    %17 = vector.extract_strided_slice %15 {offsets = [0, 0], sizes = [8, 32], strides = [1, 1]} : vector<8x128xf32> to vector<8x32xf32>
    %18 = vector.extract_strided_slice %15 {offsets = [0, 32], sizes = [8, 32], strides = [1, 1]} : vector<8x128xf32> to vector<8x32xf32>
    %19 = vector.extract_strided_slice %16 {offsets = [0, 64], sizes = [8, 32], strides = [1, 1]} : vector<8x128xf32> to vector<8x32xf32>
    %20 = vector.extract_strided_slice %15 {offsets = [0, 96], sizes = [8, 32], strides = [1, 1]} : vector<8x128xf32> to vector<8x32xf32>
    %21 = arith.mulf %18, %5 : vector<8x32xf32>
    %22 = arith.mulf %17, %19 : vector<8x32xf32>
    %23 = arith.addf %21, %22 : vector<8x32xf32>
    %24 = math.tanh %23 : vector<8x32xf32>
    %25 = arith.mulf %20, %24 : vector<8x32xf32>
    %c8 = arith.constant 8 : index
    %c0_13 = arith.constant 0 : index
    %26 = vector.load %arg8[%c8, %c0_13] : memref<64x128xf32, #tpu.memory_space<vmem>>, vector<8x128xf32>
    %27 = arith.truncf %25 : vector<8x32xf32> to vector<8x32xbf16>
    %c0_14 = arith.constant 0 : index
    %c0_15 = arith.constant 0 : index
    %28 = vector.load %arg2[%c0_14, %c0_15] : memref<32x128xbf16, #tpu.memory_space<vmem>>, vector<32x128xbf16>
    %cst_16 = arith.constant dense<0.000000e+00> : vector<8x128xf32>
    %29 = tpu.matmul %27, %28, %cst_16 {dimension_numbers = #tpu.dot_dimension_numbers<[1], [0], [0], [1], [0, 0, 1, 1], [], []>} : vector<8x32xbf16>, vector<32x128xbf16>, vector<8x128xf32> -> vector<8x128xf32>
    %30 = arith.addf %26, %29 : vector<8x128xf32>
    %31 = arith.negf %30 : vector<8x128xf32>
    %32 = math.exp %31 : vector<8x128xf32>
    %cst_17 = arith.constant 1.000000e+00 : f32
    %33 = vector.broadcast %cst_17 : f32 to vector<8x128xf32>
    %34 = arith.addf %33, %32 : vector<8x128xf32>
    %35 = arith.divf %33, %34 : vector<8x128xf32>
    %36 = math.tanh %30 : vector<8x128xf32>
    %37 = vector.extract_strided_slice %35 {offsets = [0, 0], sizes = [8, 32], strides = [1, 1]} : vector<8x128xf32> to vector<8x32xf32>
    %38 = vector.extract_strided_slice %35 {offsets = [0, 32], sizes = [8, 32], strides = [1, 1]} : vector<8x128xf32> to vector<8x32xf32>
    %39 = vector.extract_strided_slice %36 {offsets = [0, 64], sizes = [8, 32], strides = [1, 1]} : vector<8x128xf32> to vector<8x32xf32>
    %40 = vector.extract_strided_slice %35 {offsets = [0, 96], sizes = [8, 32], strides = [1, 1]} : vector<8x128xf32> to vector<8x32xf32>
    %41 = arith.mulf %38, %23 : vector<8x32xf32>
    %42 = arith.mulf %37, %39 : vector<8x32xf32>
    %43 = arith.addf %41, %42 : vector<8x32xf32>
    %44 = math.tanh %43 : vector<8x32xf32>
    %45 = arith.mulf %40, %44 : vector<8x32xf32>
    %c16 = arith.constant 16 : index
    %c0_18 = arith.constant 0 : index
    %46 = vector.load %arg8[%c16, %c0_18] : memref<64x128xf32, #tpu.memory_space<vmem>>, vector<8x128xf32>
    %47 = arith.truncf %45 : vector<8x32xf32> to vector<8x32xbf16>
    %c0_19 = arith.constant 0 : index
    %c0_20 = arith.constant 0 : index
    %48 = vector.load %arg2[%c0_19, %c0_20] : memref<32x128xbf16, #tpu.memory_space<vmem>>, vector<32x128xbf16>
    %cst_21 = arith.constant dense<0.000000e+00> : vector<8x128xf32>
    %49 = tpu.matmul %47, %48, %cst_21 {dimension_numbers = #tpu.dot_dimension_numbers<[1], [0], [0], [1], [0, 0, 1, 1], [], []>} : vector<8x32xbf16>, vector<32x128xbf16>, vector<8x128xf32> -> vector<8x128xf32>
    %50 = arith.addf %46, %49 : vector<8x128xf32>
    %51 = arith.negf %50 : vector<8x128xf32>
    %52 = math.exp %51 : vector<8x128xf32>
    %cst_22 = arith.constant 1.000000e+00 : f32
    %53 = vector.broadcast %cst_22 : f32 to vector<8x128xf32>
    %54 = arith.addf %53, %52 : vector<8x128xf32>
    %55 = arith.divf %53, %54 : vector<8x128xf32>
    %56 = math.tanh %50 : vector<8x128xf32>
    %57 = vector.extract_strided_slice %55 {offsets = [0, 0], sizes = [8, 32], strides = [1, 1]} : vector<8x128xf32> to vector<8x32xf32>
    %58 = vector.extract_strided_slice %55 {offsets = [0, 32], sizes = [8, 32], strides = [1, 1]} : vector<8x128xf32> to vector<8x32xf32>
    %59 = vector.extract_strided_slice %56 {offsets = [0, 64], sizes = [8, 32], strides = [1, 1]} : vector<8x128xf32> to vector<8x32xf32>
    %60 = vector.extract_strided_slice %55 {offsets = [0, 96], sizes = [8, 32], strides = [1, 1]} : vector<8x128xf32> to vector<8x32xf32>
    %61 = arith.mulf %58, %43 : vector<8x32xf32>
    %62 = arith.mulf %57, %59 : vector<8x32xf32>
    %63 = arith.addf %61, %62 : vector<8x32xf32>
    %64 = math.tanh %63 : vector<8x32xf32>
    %65 = arith.mulf %60, %64 : vector<8x32xf32>
    %c24 = arith.constant 24 : index
    %c0_23 = arith.constant 0 : index
    %66 = vector.load %arg8[%c24, %c0_23] : memref<64x128xf32, #tpu.memory_space<vmem>>, vector<8x128xf32>
    %67 = arith.truncf %65 : vector<8x32xf32> to vector<8x32xbf16>
    %c0_24 = arith.constant 0 : index
    %c0_25 = arith.constant 0 : index
    %68 = vector.load %arg2[%c0_24, %c0_25] : memref<32x128xbf16, #tpu.memory_space<vmem>>, vector<32x128xbf16>
    %cst_26 = arith.constant dense<0.000000e+00> : vector<8x128xf32>
    %69 = tpu.matmul %67, %68, %cst_26 {dimension_numbers = #tpu.dot_dimension_numbers<[1], [0], [0], [1], [0, 0, 1, 1], [], []>} : vector<8x32xbf16>, vector<32x128xbf16>, vector<8x128xf32> -> vector<8x128xf32>
    %70 = arith.addf %66, %69 : vector<8x128xf32>
    %71 = arith.negf %70 : vector<8x128xf32>
    %72 = math.exp %71 : vector<8x128xf32>
    %cst_27 = arith.constant 1.000000e+00 : f32
    %73 = vector.broadcast %cst_27 : f32 to vector<8x128xf32>
    %74 = arith.addf %73, %72 : vector<8x128xf32>
    %75 = arith.divf %73, %74 : vector<8x128xf32>
    %76 = math.tanh %70 : vector<8x128xf32>
    %77 = vector.extract_strided_slice %75 {offsets = [0, 0], sizes = [8, 32], strides = [1, 1]} : vector<8x128xf32> to vector<8x32xf32>
    %78 = vector.extract_strided_slice %75 {offsets = [0, 32], sizes = [8, 32], strides = [1, 1]} : vector<8x128xf32> to vector<8x32xf32>
    %79 = vector.extract_strided_slice %76 {offsets = [0, 64], sizes = [8, 32], strides = [1, 1]} : vector<8x128xf32> to vector<8x32xf32>
    %80 = vector.extract_strided_slice %75 {offsets = [0, 96], sizes = [8, 32], strides = [1, 1]} : vector<8x128xf32> to vector<8x32xf32>
    %81 = arith.mulf %78, %63 : vector<8x32xf32>
    %82 = arith.mulf %77, %79 : vector<8x32xf32>
    %83 = arith.addf %81, %82 : vector<8x32xf32>
    %84 = math.tanh %83 : vector<8x32xf32>
    %85 = arith.mulf %80, %84 : vector<8x32xf32>
    %c32 = arith.constant 32 : index
    %c0_28 = arith.constant 0 : index
    %86 = vector.load %arg8[%c32, %c0_28] : memref<64x128xf32, #tpu.memory_space<vmem>>, vector<8x128xf32>
    %87 = arith.truncf %85 : vector<8x32xf32> to vector<8x32xbf16>
    %c0_29 = arith.constant 0 : index
    %c0_30 = arith.constant 0 : index
    %88 = vector.load %arg2[%c0_29, %c0_30] : memref<32x128xbf16, #tpu.memory_space<vmem>>, vector<32x128xbf16>
    %cst_31 = arith.constant dense<0.000000e+00> : vector<8x128xf32>
    %89 = tpu.matmul %87, %88, %cst_31 {dimension_numbers = #tpu.dot_dimension_numbers<[1], [0], [0], [1], [0, 0, 1, 1], [], []>} : vector<8x32xbf16>, vector<32x128xbf16>, vector<8x128xf32> -> vector<8x128xf32>
    %90 = arith.addf %86, %89 : vector<8x128xf32>
    %91 = arith.negf %90 : vector<8x128xf32>
    %92 = math.exp %91 : vector<8x128xf32>
    %cst_32 = arith.constant 1.000000e+00 : f32
    %93 = vector.broadcast %cst_32 : f32 to vector<8x128xf32>
    %94 = arith.addf %93, %92 : vector<8x128xf32>
    %95 = arith.divf %93, %94 : vector<8x128xf32>
    %96 = math.tanh %90 : vector<8x128xf32>
    %97 = vector.extract_strided_slice %95 {offsets = [0, 0], sizes = [8, 32], strides = [1, 1]} : vector<8x128xf32> to vector<8x32xf32>
    %98 = vector.extract_strided_slice %95 {offsets = [0, 32], sizes = [8, 32], strides = [1, 1]} : vector<8x128xf32> to vector<8x32xf32>
    %99 = vector.extract_strided_slice %96 {offsets = [0, 64], sizes = [8, 32], strides = [1, 1]} : vector<8x128xf32> to vector<8x32xf32>
    %100 = vector.extract_strided_slice %95 {offsets = [0, 96], sizes = [8, 32], strides = [1, 1]} : vector<8x128xf32> to vector<8x32xf32>
    %101 = arith.mulf %98, %83 : vector<8x32xf32>
    %102 = arith.mulf %97, %99 : vector<8x32xf32>
    %103 = arith.addf %101, %102 : vector<8x32xf32>
    %104 = math.tanh %103 : vector<8x32xf32>
    %105 = arith.mulf %100, %104 : vector<8x32xf32>
    %c40 = arith.constant 40 : index
    %c0_33 = arith.constant 0 : index
    %106 = vector.load %arg8[%c40, %c0_33] : memref<64x128xf32, #tpu.memory_space<vmem>>, vector<8x128xf32>
    %107 = arith.truncf %105 : vector<8x32xf32> to vector<8x32xbf16>
    %c0_34 = arith.constant 0 : index
    %c0_35 = arith.constant 0 : index
    %108 = vector.load %arg2[%c0_34, %c0_35] : memref<32x128xbf16, #tpu.memory_space<vmem>>, vector<32x128xbf16>
    %cst_36 = arith.constant dense<0.000000e+00> : vector<8x128xf32>
    %109 = tpu.matmul %107, %108, %cst_36 {dimension_numbers = #tpu.dot_dimension_numbers<[1], [0], [0], [1], [0, 0, 1, 1], [], []>} : vector<8x32xbf16>, vector<32x128xbf16>, vector<8x128xf32> -> vector<8x128xf32>
    %110 = arith.addf %106, %109 : vector<8x128xf32>
    %111 = arith.negf %110 : vector<8x128xf32>
    %112 = math.exp %111 : vector<8x128xf32>
    %cst_37 = arith.constant 1.000000e+00 : f32
    %113 = vector.broadcast %cst_37 : f32 to vector<8x128xf32>
    %114 = arith.addf %113, %112 : vector<8x128xf32>
    %115 = arith.divf %113, %114 : vector<8x128xf32>
    %116 = math.tanh %110 : vector<8x128xf32>
    %117 = vector.extract_strided_slice %115 {offsets = [0, 0], sizes = [8, 32], strides = [1, 1]} : vector<8x128xf32> to vector<8x32xf32>
    %118 = vector.extract_strided_slice %115 {offsets = [0, 32], sizes = [8, 32], strides = [1, 1]} : vector<8x128xf32> to vector<8x32xf32>
    %119 = vector.extract_strided_slice %116 {offsets = [0, 64], sizes = [8, 32], strides = [1, 1]} : vector<8x128xf32> to vector<8x32xf32>
    %120 = vector.extract_strided_slice %115 {offsets = [0, 96], sizes = [8, 32], strides = [1, 1]} : vector<8x128xf32> to vector<8x32xf32>
    %121 = arith.mulf %118, %103 : vector<8x32xf32>
    %122 = arith.mulf %117, %119 : vector<8x32xf32>
    %123 = arith.addf %121, %122 : vector<8x32xf32>
    %124 = math.tanh %123 : vector<8x32xf32>
    %125 = arith.mulf %120, %124 : vector<8x32xf32>
    %c48 = arith.constant 48 : index
    %c0_38 = arith.constant 0 : index
    %126 = vector.load %arg8[%c48, %c0_38] : memref<64x128xf32, #tpu.memory_space<vmem>>, vector<8x128xf32>
    %127 = arith.truncf %125 : vector<8x32xf32> to vector<8x32xbf16>
    %c0_39 = arith.constant 0 : index
    %c0_40 = arith.constant 0 : index
    %128 = vector.load %arg2[%c0_39, %c0_40] : memref<32x128xbf16, #tpu.memory_space<vmem>>, vector<32x128xbf16>
    %cst_41 = arith.constant dense<0.000000e+00> : vector<8x128xf32>
    %129 = tpu.matmul %127, %128, %cst_41 {dimension_numbers = #tpu.dot_dimension_numbers<[1], [0], [0], [1], [0, 0, 1, 1], [], []>} : vector<8x32xbf16>, vector<32x128xbf16>, vector<8x128xf32> -> vector<8x128xf32>
    %130 = arith.addf %126, %129 : vector<8x128xf32>
    %131 = arith.negf %130 : vector<8x128xf32>
    %132 = math.exp %131 : vector<8x128xf32>
    %cst_42 = arith.constant 1.000000e+00 : f32
    %133 = vector.broadcast %cst_42 : f32 to vector<8x128xf32>
    %134 = arith.addf %133, %132 : vector<8x128xf32>
    %135 = arith.divf %133, %134 : vector<8x128xf32>
    %136 = math.tanh %130 : vector<8x128xf32>
    %137 = vector.extract_strided_slice %135 {offsets = [0, 0], sizes = [8, 32], strides = [1, 1]} : vector<8x128xf32> to vector<8x32xf32>
    %138 = vector.extract_strided_slice %135 {offsets = [0, 32], sizes = [8, 32], strides = [1, 1]} : vector<8x128xf32> to vector<8x32xf32>
    %139 = vector.extract_strided_slice %136 {offsets = [0, 64], sizes = [8, 32], strides = [1, 1]} : vector<8x128xf32> to vector<8x32xf32>
    %140 = vector.extract_strided_slice %135 {offsets = [0, 96], sizes = [8, 32], strides = [1, 1]} : vector<8x128xf32> to vector<8x32xf32>
    %141 = arith.mulf %138, %123 : vector<8x32xf32>
    %142 = arith.mulf %137, %139 : vector<8x32xf32>
    %143 = arith.addf %141, %142 : vector<8x32xf32>
    %144 = math.tanh %143 : vector<8x32xf32>
    %145 = arith.mulf %140, %144 : vector<8x32xf32>
    %c56 = arith.constant 56 : index
    %c0_43 = arith.constant 0 : index
    %146 = vector.load %arg8[%c56, %c0_43] : memref<64x128xf32, #tpu.memory_space<vmem>>, vector<8x128xf32>
    %147 = arith.truncf %145 : vector<8x32xf32> to vector<8x32xbf16>
    %c0_44 = arith.constant 0 : index
    %c0_45 = arith.constant 0 : index
    %148 = vector.load %arg2[%c0_44, %c0_45] : memref<32x128xbf16, #tpu.memory_space<vmem>>, vector<32x128xbf16>
    %cst_46 = arith.constant dense<0.000000e+00> : vector<8x128xf32>
    %149 = tpu.matmul %147, %148, %cst_46 {dimension_numbers = #tpu.dot_dimension_numbers<[1], [0], [0], [1], [0, 0, 1, 1], [], []>} : vector<8x32xbf16>, vector<32x128xbf16>, vector<8x128xf32> -> vector<8x128xf32>
    %150 = arith.addf %146, %149 : vector<8x128xf32>
    %151 = arith.negf %150 : vector<8x128xf32>
    %152 = math.exp %151 : vector<8x128xf32>
    %cst_47 = arith.constant 1.000000e+00 : f32
    %153 = vector.broadcast %cst_47 : f32 to vector<8x128xf32>
    %154 = arith.addf %153, %152 : vector<8x128xf32>
    %155 = arith.divf %153, %154 : vector<8x128xf32>
    %156 = math.tanh %150 : vector<8x128xf32>
    %157 = vector.extract_strided_slice %155 {offsets = [0, 0], sizes = [8, 32], strides = [1, 1]} : vector<8x128xf32> to vector<8x32xf32>
    %158 = vector.extract_strided_slice %155 {offsets = [0, 32], sizes = [8, 32], strides = [1, 1]} : vector<8x128xf32> to vector<8x32xf32>
    %159 = vector.extract_strided_slice %156 {offsets = [0, 64], sizes = [8, 32], strides = [1, 1]} : vector<8x128xf32> to vector<8x32xf32>
    %160 = vector.extract_strided_slice %155 {offsets = [0, 96], sizes = [8, 32], strides = [1, 1]} : vector<8x128xf32> to vector<8x32xf32>
    %161 = arith.mulf %158, %143 : vector<8x32xf32>
    %162 = arith.mulf %157, %159 : vector<8x32xf32>
    %163 = arith.addf %161, %162 : vector<8x32xf32>
    %164 = math.tanh %163 : vector<8x32xf32>
    %165 = arith.mulf %160, %164 : vector<8x32xf32>
    %166 = arith.truncf %165 : vector<8x32xf32> to vector<8x32xbf16>
    %c0_48 = arith.constant 0 : index
    %c0_49 = arith.constant 0 : index
    %167 = vector.load %arg3[%c0_48, %c0_49] : memref<32x128xbf16, #tpu.memory_space<vmem>>, vector<32x128xbf16>
    %cst_50 = arith.constant dense<0.000000e+00> : vector<8x128xf32>
    %168 = tpu.matmul %166, %167, %cst_50 {dimension_numbers = #tpu.dot_dimension_numbers<[1], [0], [0], [1], [0, 0, 1, 1], [], []>} : vector<8x32xbf16>, vector<32x128xbf16>, vector<8x128xf32> -> vector<8x128xf32>
    %c0_51 = arith.constant 0 : index
    %c0_52 = arith.constant 0 : index
    %169 = vector.load %arg4[%c0_51, %c0_52] : memref<1x128xf32, #tpu.memory_space<vmem>>, vector<1x128xf32>
    %170 = vector.broadcast %169 : vector<1x128xf32> to vector<8x128xf32>
    %171 = arith.addf %168, %170 : vector<8x128xf32>
    %cst_53 = arith.constant 0.000000e+00 : f32
    %172 = vector.broadcast %cst_53 : f32 to vector<8x128xf32>
    %173 = arith.maximumf %171, %172 : vector<8x128xf32>
    %174 = arith.truncf %173 : vector<8x128xf32> to vector<8x128xbf16>
    %c0_54 = arith.constant 0 : index
    %c0_55 = arith.constant 0 : index
    %175 = vector.load %arg5[%c0_54, %c0_55] : memref<128x128xbf16, #tpu.memory_space<vmem>>, vector<128x128xbf16>
    %cst_56 = arith.constant dense<0.000000e+00> : vector<8x128xf32>
    %176 = tpu.matmul %174, %175, %cst_56 {dimension_numbers = #tpu.dot_dimension_numbers<[1], [0], [0], [1], [0, 0, 1, 1], [], []>} : vector<8x128xbf16>, vector<128x128xbf16>, vector<8x128xf32> -> vector<8x128xf32>
    %c0_57 = arith.constant 0 : index
    %c0_58 = arith.constant 0 : index
    %177 = vector.load %arg6[%c0_57, %c0_58] : memref<1x128xf32, #tpu.memory_space<vmem>>, vector<1x128xf32>
    %178 = vector.broadcast %177 : vector<1x128xf32> to vector<8x128xf32>
    %179 = arith.addf %176, %178 : vector<8x128xf32>
    %cst_59 = arith.constant dense<0xFF800000> : vector<8xf32>
    %180 = vector.multi_reduction <maximumf>, %179, %cst_59 [1] : vector<8x128xf32> to vector<8xf32>
    %181 = vector.shape_cast %180 : vector<8xf32> to vector<8x1xf32>
    %182 = vector.broadcast %181 : vector<8x1xf32> to vector<8x128xf32>
    %183 = arith.subf %179, %182 : vector<8x128xf32>
    %184 = math.exp %183 : vector<8x128xf32>
    %cst_60 = arith.constant dense<0.000000e+00> : vector<8xf32>
    %185 = vector.multi_reduction <add>, %184, %cst_60 [1] : vector<8x128xf32> to vector<8xf32>
    %186 = vector.shape_cast %185 : vector<8xf32> to vector<8x1xf32>
    %187 = tpu.reciprocal %186 {approx = true} : vector<8x1xf32> -> vector<8x1xf32>
    %188 = vector.broadcast %187 : vector<8x1xf32> to vector<8x128xf32>
    %189 = arith.mulf %184, %188 : vector<8x128xf32>
    %c0_61 = arith.constant 0 : index
    %c0_62 = arith.constant 0 : index
    %190 = vector.load %arg7[%c0_61, %c0_62] : memref<8x128xf32, #tpu.memory_space<vmem>>, vector<8x128xf32>
    tpu.vector_store %arg7[%c0_61, %c0_62], %189 {strides = array<i32>} : memref<8x128xf32, #tpu.memory_space<vmem>>, vector<8x128xf32>,
    return
  }
}

</mosaic_0001>

<llo_original>
// kernel: lstm_model_forward.1
$region0: #{lstm_model_forward.1}
  #allocation0 [shape = 'u32[]', space=smem, size = 0x4, offset = 0x4, fixed_abs, tag = 'smem constant byte address 0x4 - core index']
  #allocation1 [shape = 'u32[144,128]{1,0:T(1,128)}', space=vmem, size = 0x12000, scoped, tag = 'internal scratch']
  #allocation2 [shape = 'f32[64,128]{1,0:T(8,128)}', space=vmem, size = 0x8000, scoped, tag = 'scratch operand']
  %s0 = inlined_call_operand.vmem [shape: bf16[64,5], index: 0, kind: input, shape index: {}]
  %s1 = inlined_call_operand.vmem [shape: bf16[5,128], index: 1, kind: input, shape index: {}]
  %s2 = inlined_call_operand.vmem [shape: bf16[32,128], index: 2, kind: input, shape index: {}]
  %s3 = inlined_call_operand.vmem [shape: bf16[32,128], index: 3, kind: input, shape index: {}]
  %s4 = inlined_call_operand.vmem [shape: f32[1,128], index: 4, kind: input, shape index: {}]
  %s5 = inlined_call_operand.vmem [shape: bf16[128,128], index: 5, kind: input, shape index: {}]
  %s6 = inlined_call_operand.vmem [shape: f32[1,128], index: 6, kind: input, shape index: {}]
  %s7 = inlined_call_operand.vmem [shape: f32[8,128], index: 7, kind: output, shape index: {}]
  %s8 = sld [smem:[#allocation0]]
  $region38: #{lstm_model_forward.1} parent=0
    _
  %s10 = ssub.s32 1, %s8
  %s11 = scalar_select 0, %s10, %s8
  // Predicated region
  $region2: #{lstm_model_forward.1} parent=0 // pred_check
    _
  $region3: #{lstm_model_forward.1} parent=0 // pred_check_branch
    %13 = sbr.rel (0) target = $region5
  $region4: #{lstm_model_forward.1} parent=0 // pred_region
    _
  $region5: #{lstm_model_forward.1} parent=0 // pred_fallthru
    _
  // Predicated region
  $region6: #{lstm_model_forward.1} parent=0 // pred_check
    _
  $region7: #{lstm_model_forward.1} parent=0 // pred_check_branch
    %15 = sbr.rel (0) target = $region9
  $region8: #{lstm_model_forward.1} parent=0 // pred_region
    _
  $region9: #{lstm_model_forward.1} parent=0 // pred_fallthru
    _
  // Predicated region
  $region10: #{lstm_model_forward.1} parent=0 // pred_check
    _
  $region11: #{lstm_model_forward.1} parent=0 // pred_check_branch
    %17 = sbr.rel (0) target = $region13
  $region12: #{lstm_model_forward.1} parent=0 // pred_region
    _
  $region13: #{lstm_model_forward.1} parent=0 // pred_fallthru
    _
  // Predicated region
  $region14: #{lstm_model_forward.1} parent=0 // pred_check
    _
  $region15: #{lstm_model_forward.1} parent=0 // pred_check_branch
    %19 = sbr.rel (0) target = $region17
  $region16: #{lstm_model_forward.1} parent=0 // pred_region
    _
  $region17: #{lstm_model_forward.1} parent=0 // pred_fallthru
    _
  // Predicated region
  $region18: #{lstm_model_forward.1} parent=0 // pred_check
    _
  $region19: #{lstm_model_forward.1} parent=0 // pred_check_branch
    %21 = sbr.rel (0) target = $region21
  $region20: #{lstm_model_forward.1} parent=0 // pred_region
    _
  $region21: #{lstm_model_forward.1} parent=0 // pred_fallthru
    _
  // Predicated region
  $region22: #{lstm_model_forward.1} parent=0 // pred_check
    _
  $region23: #{lstm_model_forward.1} parent=0 // pred_check_branch
    %23 = sbr.rel (0) target = $region25
  $region24: #{lstm_model_forward.1} parent=0 // pred_region
    _
  $region25: #{lstm_model_forward.1} parent=0 // pred_fallthru
    _
  // Predicated region
  $region26: #{lstm_model_forward.1} parent=0 // pred_check
    _
  $region27: #{lstm_model_forward.1} parent=0 // pred_check_branch
    %25 = sbr.rel (0) target = $region29
  $region28: #{lstm_model_forward.1} parent=0 // pred_region
    _
  $region29: #{lstm_model_forward.1} parent=0 // pred_fallthru
    _
  %v27 = vld [vmem:[%s0] sm:$0xf]
  %v28 = vld [vmem:[%s0 + $0x4] sm:$0xf]
  %v29 = vld [vmem:[%s0 + $0x8] sm:$0xf]
  %v30 = vld [vmem:[%s0 + $0xc] sm:$0xf]
  %v31 = vld [vmem:[%s0 + $0x10] sm:$0xf]
  %v32 = vld [vmem:[%s0 + $0x14] sm:$0xf]
  %v33 = vld [vmem:[%s0 + $0x18] sm:$0xf]
  %v34 = vld [vmem:[%s0 + $0x1c] sm:$0xf]
  %v35 = vld [vmem:[%s1] sm:$0x7]
  %v44 = vunpack.c.l.b16 %v27
  %v45 = vunpack.c.l.b16 %v28
  %v46 = vunpack.c.l.b16 %v29
  %v47 = vunpack.c.l.b16 %v30
  %v48 = vunpack.c.l.b16 %v31
  %v49 = vunpack.c.l.b16 %v32
  %v50 = vunpack.c.l.b16 %v33
  %v51 = vunpack.c.l.b16 %v34
  %v52 = vpack.c.b16 %v45, %v44
  %v53 = vpack.c.b16 %v47, %v46
  %v54 = vpack.c.b16 %v49, %v48
  %v55 = vpack.c.b16 %v51, %v50
  %vm56 = vcmask 39936
  %v58 = vsel %vm56, %v52, 0
  %v61 = vsel %vm56, %v53, 0
  %v64 = vsel %vm56, %v54, 0
  %v67 = vsel %vm56, %v55, 0
  %vm69 = vcmask 1041408
  %vm70 = vcmask 1042432
  %v71 = vsel %vm69, 4294967295, 65535
  %v72 = vsel %vm70, %v71, 0
  %v74 = vand.u32 %v35, %v72
  %76 = vmatprep.subr.bf16.mxu0 0
  %77 = vmatpush1.bf16.msra.mxu0 %v74
  %78 = vmatprep.subr.bf16.mxu0 0
  %79 = vmatpush1.bf16.msra.mxu0 0
  %80 = vmatprep.subr.bf16.mxu0 0
  %81 = vmatpush1.bf16.msra.mxu0 0
  %82 = vmatprep.subr.bf16.mxu0 0
  %83 = vmatpush1.bf16.msra.mxu0 0
  %84 = vmatprep.subr.bf16.mxu0 0
  %85 = vmatpush1.bf16.msra.mxu0 0
  %86 = vmatprep.subr.bf16.mxu0 0
  %87 = vmatpush1.bf16.msra.mxu0 0
  %88 = vmatprep.subr.bf16.mxu0 0
  %89 = vmatpush1.bf16.msra.mxu0 0
  %90 = vmatprep.subr.bf16.mxu0 0
  %91 = vmatpush1.bf16.msra.mxu0 0
  %92 = vmatprep.subr.bf16.mxu0 0
  %93 = vmatpush1.bf16.msra.mxu0 0
  %94 = vmatprep.subr.bf16.mxu0 0
  %95 = vmatpush1.bf16.msra.mxu0 0
  %96 = vmatprep.subr.bf16.mxu0 0
  %97 = vmatpush1.bf16.msra.mxu0 0
  %98 = vmatprep.subr.bf16.mxu0 0
  %99 = vmatpush1.bf16.msra.mxu0 0
  %100 = vmatprep.subr.bf16.mxu0 0
  %101 = vmatpush1.bf16.msra.mxu0 0
  %102 = vmatprep.subr.bf16.mxu0 0
  %103 = vmatpush1.bf16.msra.mxu0 0
  %104 = vmatprep.subr.bf16.mxu0 0
  %105 = vmatpush1.bf16.msra.mxu0 0
  %106 = vmatprep.subr.bf16.mxu0 0
  %107 = vmatpush1.bf16.msra.mxu0 0
  %108 = vmatprep.mubr.bf16.mxu0 0
  %109 = vmatmul.mubr.bf16.gmra.mrb[0].mxu0 %v58
  %v110 = vpop.f32.mrb[0].mxu0
  %v111 = vadd.f32 0.0, %v110
  %v112 = vpop.f32.mrb[0].mxu0
  %v113 = vpop.f32.mrb[0].mxu0
  %v114 = vadd.f32 0.0, %v113
  %v115 = vpop.f32.mrb[0].mxu0
  %116 = vmatprep.mubr.bf16.mxu0 0
  %117 = vmatmul.mubr.bf16.gmra.mrb[0].mxu0 %v61
  %v118 = vpop.f32.mrb[0].mxu0
  %v119 = vadd.f32 0.0, %v118
  %v120 = vpop.f32.mrb[0].mxu0
  %v121 = vpop.f32.mrb[0].mxu0
  %v122 = vadd.f32 0.0, %v121
  %v123 = vpop.f32.mrb[0].mxu0
  %124 = vmatprep.mubr.bf16.mxu0 0
  %125 = vmatmul.mubr.bf16.gmra.mrb[0].mxu0 %v64
  %v126 = vpop.f32.mrb[0].mxu0
  %v127 = vadd.f32 0.0, %v126
  %v128 = vpop.f32.mrb[0].mxu0
  %v129 = vpop.f32.mrb[0].mxu0
  %v130 = vadd.f32 0.0, %v129
  %v131 = vpop.f32.mrb[0].mxu0
  %132 = vmatprep.mubr.bf16.mxu0 0
  %133 = vmatmul.mubr.bf16.gmra.mrb[0].mxu0 %v67
  %v134 = vpop.f32.mrb[0].mxu0
  %v135 = vadd.f32 0.0, %v134
  %v136 = vpop.f32.mrb[0].mxu0
  %v137 = vpop.f32.mrb[0].mxu0
  %v138 = vadd.f32 0.0, %v137
  %v139 = vpop.f32.mrb[0].mxu0
  %140 = vdwg.mxu0
  %141 = vst [vmem:[#allocation2] sm:$0xff] %v111
  %142 = vst [vmem:[#allocation2 + $0x8] sm:$0xff] %v114
  %143 = vst [vmem:[#allocation2 + $0x10] sm:$0xff] %v119
  %144 = vst [vmem:[#allocation2 + $0x18] sm:$0xff] %v122
  %145 = vst [vmem:[#allocation2 + $0x20] sm:$0xff] %v127
  %146 = vst [vmem:[#allocation2 + $0x28] sm:$0xff] %v130
  %147 = vst [vmem:[#allocation2 + $0x30] sm:$0xff] %v135
  %148 = vst [vmem:[#allocation2 + $0x38] sm:$0xff] %v138
  %v149 = vld [vmem:[#allocation2] sm:$0xff]
  %v150 = vld [vmem:[%s2] sm:$0xf]
  %v151 = vld [vmem:[%s2 + $0x4] sm:$0xf]
  %v152 = vld [vmem:[%s2 + $0x8] sm:$0xf]
  %v153 = vld [vmem:[%s2 + $0xc] sm:$0xf]
  %v158 = vunpack.c.l.b16 %v150
  %v159 = vunpack.c.l.b16 %v151
  %v160 = vunpack.c.l.b16 %v152
  %v161 = vunpack.c.l.b16 %v153
  %v162 = vpack.c.b16 %v159, %v158
  %v163 = vpack.c.b16 %v161, %v160
  %vm166 = vcmask 261120
  %v168 = vsel %vm166, 0, 0
  %170 = vmatprep.subr.bf16.mxu0 0
  %171 = vmatpush1.bf16.msra.mxu0 %v162
  %172 = vmatprep.subr.bf16.mxu0 0
  %173 = vmatpush1.bf16.msra.mxu0 %v163
  %174 = vmatprep.subr.bf16.mxu0 0
  %175 = vmatpush1.bf16.msra.mxu0 0
  %176 = vmatprep.subr.bf16.mxu0 0
  %177 = vmatpush1.bf16.msra.mxu0 0
  %178 = vmatprep.subr.bf16.mxu0 0
  %179 = vmatpush1.bf16.msra.mxu0 0
  %180 = vmatprep.subr.bf16.mxu0 0
  %181 = vmatpush1.bf16.msra.mxu0 0
  %182 = vmatprep.subr.bf16.mxu0 0
  %183 = vmatpush1.bf16.msra.mxu0 0
  %184 = vmatprep.subr.bf16.mxu0 0
  %185 = vmatpush1.bf16.msra.mxu0 0
  %186 = vmatprep.subr.bf16.mxu0 0
  %187 = vmatpush1.bf16.msra.mxu0 0
  %188 = vmatprep.subr.bf16.mxu0 0
  %189 = vmatpush1.bf16.msra.mxu0 0
  %190 = vmatprep.subr.bf16.mxu0 0
  %191 = vmatpush1.bf16.msra.mxu0 0
  %192 = vmatprep.subr.bf16.mxu0 0
  %193 = vmatpush1.bf16.msra.mxu0 0
  %194 = vmatprep.subr.bf16.mxu0 0
  %195 = vmatpush1.bf16.msra.mxu0 0
  %196 = vmatprep.subr.bf16.mxu0 0
  %197 = vmatpush1.bf16.msra.mxu0 0
  %198 = vmatprep.subr.bf16.mxu0 0
  %199 = vmatpush1.bf16.msra.mxu0 0
  %200 = vmatprep.subr.bf16.mxu0 0
  %201 = vmatpush1.bf16.msra.mxu0 0
  %202 = vmatprep.mubr.bf16.mxu0 0
  %203 = vmatmul.mubr.bf16.gmra.mrb[0].mxu0 %v168
  %v204 = vpop.f32.mrb[0].mxu0
  %v205 = vadd.f32 0.0, %v204
  %v206 = vpop.f32.mrb[0].mxu0
  %v207 = vpop.f32.mrb[0].mxu0
  %v208 = vpop.f32.mrb[0].mxu0
  %209 = vdwg.mxu0
  %v210 = vadd.f32 %v149, %v205
  %v211 = vxor.u32 %v210, 2147483648
  %v212 = vmul.f32 %v211, 1.442695
  %v213 = vpow.pop %v212
  %v214 = vadd.f32 %v213, 1.0
  %v215 = vrcp.pop %v214
  %v216 = vmul.f32 1.0, %v215
  %v217 = vtanh.pop %v210
  %v218 = vmul.f32 %v216, 0.0
  %220 = vrot.lane.b32.xlu0 %v217, 64
  %v221 = vpop.permute.xlu0 %220
  %v223 = vmul.f32 %v216, %v221
  %225 = vrot.lane.b32.xlu0 %v223, 32
  %v226 = vpop.permute.xlu0 %225
  %v228 = vadd.f32 %v218, %v226
  %v229 = vtanh.pop %v228
  %231 = vrot.lane.b32.xlu0 %v229, 64
  %v232 = vpop.permute.xlu0 %231
  %v234 = vmul.f32 %v216, %v232
  %v235 = vld [vmem:[#allocation2 + $0x8] sm:$0xff]
  %v236 = vpack.c.bf16 %v234, %v234
  %238 = vrot.lane.b32.xlu0 %v236, 32
  %v239 = vpop.permute.xlu0 %238
  %v241 = vsel %vm166, %v239, 0
  %243 = vmatprep.subr.bf16.mxu0 0
  %244 = vmatpush1.bf16.msra.mxu0 %v162
  %245 = vmatprep.subr.bf16.mxu0 0
  %246 = vmatpush1.bf16.msra.mxu0 %v163
  %247 = vmatprep.subr.bf16.mxu0 0
  %248 = vmatpush1.bf16.msra.mxu0 0
  %249 = vmatprep.subr.bf16.mxu0 0
  %250 = vmatpush1.bf16.msra.mxu0 0
  %251 = vmatprep.subr.bf16.mxu0 0
  %252 = vmatpush1.bf16.msra.mxu0 0
  %253 = vmatprep.subr.bf16.mxu0 0
  %254 = vmatpush1.bf16.msra.mxu0 0
  %255 = vmatprep.subr.bf16.mxu0 0
  %256 = vmatpush1.bf16.msra.mxu0 0
  %257 = vmatprep.subr.bf16.mxu0 0
  %258 = vmatpush1.bf16.msra.mxu0 0
  %259 = vmatprep.subr.bf16.mxu0 0
  %260 = vmatpush1.bf16.msra.mxu0 0
  %261 = vmatprep.subr.bf16.mxu0 0
  %262 = vmatpush1.bf16.msra.mxu0 0
  %263 = vmatprep.subr.bf16.mxu0 0
  %264 = vmatpush1.bf16.msra.mxu0 0
  %265 = vmatprep.subr.bf16.mxu0 0
  %266 = vmatpush1.bf16.msra.mxu0 0
  %267 = vmatprep.subr.bf16.mxu0 0
  %268 = vmatpush1.bf16.msra.mxu0 0
  %269 = vmatprep.subr.bf16.mxu0 0
  %270 = vmatpush1.bf16.msra.mxu0 0
  %271 = vmatprep.subr.bf16.mxu0 0
  %272 = vmatpush1.bf16.msra.mxu0 0
  %273 = vmatprep.subr.bf16.mxu0 0
  %274 = vmatpush1.bf16.msra.mxu0 0
  %275 = vmatprep.mubr.bf16.mxu0 0
  %276 = vmatmul.mubr.bf16.gmra.mrb[0].mxu0 %v241
  %v277 = vpop.f32.mrb[0].mxu0
  %v278 = vadd.f32 0.0, %v277
  %v279 = vpop.f32.mrb[0].mxu0
  %v280 = vpop.f32.mrb[0].mxu0
  %v281 = vpop.f32.mrb[0].mxu0
  %282 = vdwg.mxu0
  %v283 = vadd.f32 %v235, %v278
  %v284 = vxor.u32 %v283, 2147483648
  %v285 = vmul.f32 %v284, 1.442695
  %v286 = vpow.pop %v285
  %v287 = vadd.f32 %v286, 1.0
  %v288 = vrcp.pop %v287
  %v289 = vmul.f32 1.0, %v288
  %v290 = vtanh.pop %v283
  %v291 = vmul.f32 %v289, %v228
  %293 = vrot.lane.b32.xlu0 %v290, 64
  %v294 = vpop.permute.xlu0 %293
  %v296 = vmul.f32 %v289, %v294
  %298 = vrot.lane.b32.xlu0 %v296, 32
  %v299 = vpop.permute.xlu0 %298
  %v301 = vadd.f32 %v291, %v299
  %v302 = vtanh.pop %v301
  %304 = vrot.lane.b32.xlu0 %v302, 64
  %v305 = vpop.permute.xlu0 %304
  %v307 = vmul.f32 %v289, %v305
  %v308 = vld [vmem:[#allocation2 + $0x10] sm:$0xff]
  %v309 = vpack.c.bf16 %v307, %v307
  %311 = vrot.lane.b32.xlu0 %v309, 32
  %v312 = vpop.permute.xlu0 %311
  %v314 = vsel %vm166, %v312, 0
  %316 = vmatprep.subr.bf16.mxu0 0
  %317 = vmatpush1.bf16.msra.mxu0 %v162
  %318 = vmatprep.subr.bf16.mxu0 0
  %319 = vmatpush1.bf16.msra.mxu0 %v163
  %320 = vmatprep.subr.bf16.mxu0 0
  %321 = vmatpush1.bf16.msra.mxu0 0
  %322 = vmatprep.subr.bf16.mxu0 0
  %323 = vmatpush1.bf16.msra.mxu0 0
  %324 = vmatprep.subr.bf16.mxu0 0
  %325 = vmatpush1.bf16.msra.mxu0 0
  %326 = vmatprep.subr.bf16.mxu0 0
  %327 = vmatpush1.bf16.msra.mxu0 0
  %328 = vmatprep.subr.bf16.mxu0 0
  %329 = vmatpush1.bf16.msra.mxu0 0
  %330 = vmatprep.subr.bf16.mxu0 0
  %331 = vmatpush1.bf16.msra.mxu0 0
  %332 = vmatprep.subr.bf16.mxu0 0
  %333 = vmatpush1.bf16.msra.mxu0 0
  %334 = vmatprep.subr.bf16.mxu0 0
  %335 = vmatpush1.bf16.msra.mxu0 0
  %336 = vmatprep.subr.bf16.mxu0 0
  %337 = vmatpush1.bf16.msra.mxu0 0
  %338 = vmatprep.subr.bf16.mxu0 0
  %339 = vmatpush1.bf16.msra.mxu0 0
  %340 = vmatprep.subr.bf16.mxu0 0
  %341 = vmatpush1.bf16.msra.mxu0 0
  %342 = vmatprep.subr.bf16.mxu0 0
  %343 = vmatpush1.bf16.msra.mxu0 0
  %344 = vmatprep.subr.bf16.mxu0 0
  %345 = vmatpush1.bf16.msra.mxu0 0
  %346 = vmatprep.subr.bf16.mxu0 0
  %347 = vmatpush1.bf16.msra.mxu0 0
  %348 = vmatprep.mubr.bf16.mxu0 0
  %349 = vmatmul.mubr.bf16.gmra.mrb[0].mxu0 %v314
  %v350 = vpop.f32.mrb[0].mxu0
  %v351 = vadd.f32 0.0, %v350
  %v352 = vpop.f32.mrb[0].mxu0
  %v353 = vpop.f32.mrb[0].mxu0
  %v354 = vpop.f32.mrb[0].mxu0
  %355 = vdwg.mxu0
  %v356 = vadd.f32 %v308, %v351
  %v357 = vxor.u32 %v356, 2147483648
  %v358 = vmul.f32 %v357, 1.442695
  %v359 = vpow.pop %v358
  %v360 = vadd.f32 %v359, 1.0
  %v361 = vrcp.pop %v360
  %v362 = vmul.f32 1.0, %v361
  %v363 = vtanh.pop %v356
  %v364 = vmul.f32 %v362, %v301
  %366 = vrot.lane.b32.xlu0 %v363, 64
  %v367 = vpop.permute.xlu0 %366
  %v369 = vmul.f32 %v362, %v367
  %371 = vrot.lane.b32.xlu0 %v369, 32
  %v372 = vpop.permute.xlu0 %371
  %v374 = vadd.f32 %v364, %v372
  %v375 = vtanh.pop %v374
  %377 = vrot.lane.b32.xlu0 %v375, 64
  %v378 = vpop.permute.xlu0 %377
  %v380 = vmul.f32 %v362, %v378
  %v381 = vld [vmem:[#allocation2 + $0x18] sm:$0xff]
  %v382 = vpack.c.bf16 %v380, %v380
  %384 = vrot.lane.b32.xlu0 %v382, 32
  %v385 = vpop.permute.xlu0 %384
  %v387 = vsel %vm166, %v385, 0
  %389 = vmatprep.subr.bf16.mxu0 0
  %390 = vmatpush1.bf16.msra.mxu0 %v162
  %391 = vmatprep.subr.bf16.mxu0 0
  %392 = vmatpush1.bf16.msra.mxu0 %v163
  %393 = vmatprep.subr.bf16.mxu0 0
  %394 = vmatpush1.bf16.msra.mxu0 0
  %395 = vmatprep.subr.bf16.mxu0 0
  %396 = vmatpush1.bf16.msra.mxu0 0
  %397 = vmatprep.subr.bf16.mxu0 0
  %398 = vmatpush1.bf16.msra.mxu0 0
  %399 = vmatprep.subr.bf16.mxu0 0
  %400 = vmatpush1.bf16.msra.mxu0 0
  %401 = vmatprep.subr.bf16.mxu0 0
  %402 = vmatpush1.bf16.msra.mxu0 0
  %403 = vmatprep.subr.bf16.mxu0 0
  %404 = vmatpush1.bf16.msra.mxu0 0
  %405 = vmatprep.subr.bf16.mxu0 0
  %406 = vmatpush1.bf16.msra.mxu0 0
  %407 = vmatprep.subr.bf16.mxu0 0
  %408 = vmatpush1.bf16.msra.mxu0 0
  %409 = vmatprep.subr.bf16.mxu0 0
  %410 = vmatpush1.bf16.msra.mxu0 0
  %411 = vmatprep.subr.bf16.mxu0 0
  %412 = vmatpush1.bf16.msra.mxu0 0
  %413 = vmatprep.subr.bf16.mxu0 0
  %414 = vmatpush1.bf16.msra.mxu0 0
  %415 = vmatprep.subr.bf16.mxu0 0
  %416 = vmatpush1.bf16.msra.mxu0 0
  %417 = vmatprep.subr.bf16.mxu0 0
  %418 = vmatpush1.bf16.msra.mxu0 0
  %419 = vmatprep.subr.bf16.mxu0 0
  %420 = vmatpush1.bf16.msra.mxu0 0
  %421 = vmatprep.mubr.bf16.mxu0 0
  %422 = vmatmul.mubr.bf16.gmra.mrb[0].mxu0 %v387
  %v423 = vpop.f32.mrb[0].mxu0
  %v424 = vadd.f32 0.0, %v423
  %v425 = vpop.f32.mrb[0].mxu0
  %v426 = vpop.f32.mrb[0].mxu0
  %v427 = vpop.f32.mrb[0].mxu0
  %428 = vdwg.mxu0
  %v429 = vadd.f32 %v381, %v424
  %v430 = vxor.u32 %v429, 2147483648
  %v431 = vmul.f32 %v430, 1.442695
  %v432 = vpow.pop %v431
  %v433 = vadd.f32 %v432, 1.0
  %v434 = vrcp.pop %v433
  %v435 = vmul.f32 1.0, %v434
  %v436 = vtanh.pop %v429
  %v437 = vmul.f32 %v435, %v374
  %439 = vrot.lane.b32.xlu0 %v436, 64
  %v440 = vpop.permute.xlu0 %439
  %v442 = vmul.f32 %v435, %v440
  %444 = vrot.lane.b32.xlu0 %v442, 32
  %v445 = vpop.permute.xlu0 %444
  %v447 = vadd.f32 %v437, %v445
  %v448 = vtanh.pop %v447
  %450 = vrot.lane.b32.xlu0 %v448, 64
  %v451 = vpop.permute.xlu0 %450
  %v453 = vmul.f32 %v435, %v451
  %v454 = vld [vmem:[#allocation2 + $0x20] sm:$0xff]
  %v455 = vpack.c.bf16 %v453, %v453
  %457 = vrot.lane.b32.xlu0 %v455, 32
  %v458 = vpop.permute.xlu0 %457
  %v460 = vsel %vm166, %v458, 0
  %462 = vmatprep.subr.bf16.mxu0 0
  %463 = vmatpush1.bf16.msra.mxu0 %v162
  %464 = vmatprep.subr.bf16.mxu0 0
  %465 = vmatpush1.bf16.msra.mxu0 %v163
  %466 = vmatprep.subr.bf16.mxu0 0
  %467 = vmatpush1.bf16.msra.mxu0 0
  %468 = vmatprep.subr.bf16.mxu0 0
  %469 = vmatpush1.bf16.msra.mxu0 0
  %470 = vmatprep.subr.bf16.mxu0 0
  %471 = vmatpush1.bf16.msra.mxu0 0
  %472 = vmatprep.subr.bf16.mxu0 0
  %473 = vmatpush1.bf16.msra.mxu0 0
  %474 = vmatprep.subr.bf16.mxu0 0
  %475 = vmatpush1.bf16.msra.mxu0 0
  %476 = vmatprep.subr.bf16.mxu0 0
  %477 = vmatpush1.bf16.msra.mxu0 0
  %478 = vmatprep.subr.bf16.mxu0 0
  %479 = vmatpush1.bf16.msra.mxu0 0
  %480 = vmatprep.subr.bf16.mxu0 0
  %481 = vmatpush1.bf16.msra.mxu0 0
  %482 = vmatprep.subr.bf16.mxu0 0
  %483 = vmatpush1.bf16.msra.mxu0 0
  %484 = vmatprep.subr.bf16.mxu0 0
  %485 = vmatpush1.bf16.msra.mxu0 0
  %486 = vmatprep.subr.bf16.mxu0 0
  %487 = vmatpush1.bf16.msra.mxu0 0
  %488 = vmatprep.subr.bf16.mxu0 0
  %489 = vmatpush1.bf16.msra.mxu0 0
  %490 = vmatprep.subr.bf16.mxu0 0
  %491 = vmatpush1.bf16.msra.mxu0 0
  %492 = vmatprep.subr.bf16.mxu0 0
  %493 = vmatpush1.bf16.msra.mxu0 0
  %494 = vmatprep.mubr.bf16.mxu0 0
  %495 = vmatmul.mubr.bf16.gmra.mrb[0].mxu0 %v460
  %v496 = vpop.f32.mrb[0].mxu0
  %v497 = vadd.f32 0.0, %v496
  %v498 = vpop.f32.mrb[0].mxu0
  %v499 = vpop.f32.mrb[0].mxu0
  %v500 = vpop.f32.mrb[0].mxu0
  %501 = vdwg.mxu0
  %v502 = vadd.f32 %v454, %v497
  %v503 = vxor.u32 %v502, 2147483648
  %v504 = vmul.f32 %v503, 1.442695
  %v505 = vpow.pop %v504
  %v506 = vadd.f32 %v505, 1.0
  %v507 = vrcp.pop %v506
  %v508 = vmul.f32 1.0, %v507
  %v509 = vtanh.pop %v502
  %v510 = vmul.f32 %v508, %v447
  %512 = vrot.lane.b32.xlu0 %v509, 64
  %v513 = vpop.permute.xlu0 %512
  %v515 = vmul.f32 %v508, %v513
  %517 = vrot.lane.b32.xlu0 %v515, 32
  %v518 = vpop.permute.xlu0 %517
  %v520 = vadd.f32 %v510, %v518
  %v521 = vtanh.pop %v520
  %523 = vrot.lane.b32.xlu0 %v521, 64
  %v524 = vpop.permute.xlu0 %523
  %v526 = vmul.f32 %v508, %v524
  %v527 = vld [vmem:[#allocation2 + $0x28] sm:$0xff]
  %v528 = vpack.c.bf16 %v526, %v526
  %530 = vrot.lane.b32.xlu0 %v528, 32
  %v531 = vpop.permute.xlu0 %530
  %v533 = vsel %vm166, %v531, 0
  %535 = vmatprep.subr.bf16.mxu0 0
  %536 = vmatpush1.bf16.msra.mxu0 %v162
  %537 = vmatprep.subr.bf16.mxu0 0
  %538 = vmatpush1.bf16.msra.mxu0 %v163
  %539 = vmatprep.subr.bf16.mxu0 0
  %540 = vmatpush1.bf16.msra.mxu0 0
  %541 = vmatprep.subr.bf16.mxu0 0
  %542 = vmatpush1.bf16.msra.mxu0 0
  %543 = vmatprep.subr.bf16.mxu0 0
  %544 = vmatpush1.bf16.msra.mxu0 0
  %545 = vmatprep.subr.bf16.mxu0 0
  %546 = vmatpush1.bf16.msra.mxu0 0
  %547 = vmatprep.subr.bf16.mxu0 0
  %548 = vmatpush1.bf16.msra.mxu0 0
  %549 = vmatprep.subr.bf16.mxu0 0
  %550 = vmatpush1.bf16.msra.mxu0 0
  %551 = vmatprep.subr.bf16.mxu0 0
  %552 = vmatpush1.bf16.msra.mxu0 0
  %553 = vmatprep.subr.bf16.mxu0 0
  %554 = vmatpush1.bf16.msra.mxu0 0
  %555 = vmatprep.subr.bf16.mxu0 0
  %556 = vmatpush1.bf16.msra.mxu0 0
  %557 = vmatprep.subr.bf16.mxu0 0
  %558 = vmatpush1.bf16.msra.mxu0 0
  %559 = vmatprep.subr.bf16.mxu0 0
  %560 = vmatpush1.bf16.msra.mxu0 0
  %561 = vmatprep.subr.bf16.mxu0 0
  %562 = vmatpush1.bf16.msra.mxu0 0
  %563 = vmatprep.subr.bf16.mxu0 0
  %564 = vmatpush1.bf16.msra.mxu0 0
  %565 = vmatprep.subr.bf16.mxu0 0
  %566 = vmatpush1.bf16.msra.mxu0 0
  %567 = vmatprep.mubr.bf16.mxu0 0
  %568 = vmatmul.mubr.bf16.gmra.mrb[0].mxu0 %v533
  %v569 = vpop.f32.mrb[0].mxu0
  %v570 = vadd.f32 0.0, %v569
  %v571 = vpop.f32.mrb[0].mxu0
  %v572 = vpop.f32.mrb[0].mxu0
  %v573 = vpop.f32.mrb[0].mxu0
  %574 = vdwg.mxu0
  %v575 = vadd.f32 %v527, %v570
  %v576 = vxor.u32 %v575, 2147483648
  %v577 = vmul.f32 %v576, 1.442695
  %v578 = vpow.pop %v577
  %v579 = vadd.f32 %v578, 1.0
  %v580 = vrcp.pop %v579
  %v581 = vmul.f32 1.0, %v580
  %v582 = vtanh.pop %v575
  %v583 = vmul.f32 %v581, %v520
  %585 = vrot.lane.b32.xlu0 %v582, 64
  %v586 = vpop.permute.xlu0 %585
  %v588 = vmul.f32 %v581, %v586
  %590 = vrot.lane.b32.xlu0 %v588, 32
  %v591 = vpop.permute.xlu0 %590
  %v593 = vadd.f32 %v583, %v591
  %v594 = vtanh.pop %v593
  %596 = vrot.lane.b32.xlu0 %v594, 64
  %v597 = vpop.permute.xlu0 %596
  %v599 = vmul.f32 %v581, %v597
  %v600 = vld [vmem:[#allocation2 + $0x30] sm:$0xff]
  %v601 = vpack.c.bf16 %v599, %v599
  %603 = vrot.lane.b32.xlu0 %v601, 32
  %v604 = vpop.permute.xlu0 %603
  %v606 = vsel %vm166, %v604, 0
  %608 = vmatprep.subr.bf16.mxu0 0
  %609 = vmatpush1.bf16.msra.mxu0 %v162
  %610 = vmatprep.subr.bf16.mxu0 0
  %611 = vmatpush1.bf16.msra.mxu0 %v163
  %612 = vmatprep.subr.bf16.mxu0 0
  %613 = vmatpush1.bf16.msra.mxu0 0
  %614 = vmatprep.subr.bf16.mxu0 0
  %615 = vmatpush1.bf16.msra.mxu0 0
  %616 = vmatprep.subr.bf16.mxu0 0
  %617 = vmatpush1.bf16.msra.mxu0 0
  %618 = vmatprep.subr.bf16.mxu0 0
  %619 = vmatpush1.bf16.msra.mxu0 0
  %620 = vmatprep.subr.bf16.mxu0 0
  %621 = vmatpush1.bf16.msra.mxu0 0
  %622 = vmatprep.subr.bf16.mxu0 0
  %623 = vmatpush1.bf16.msra.mxu0 0
  %624 = vmatprep.subr.bf16.mxu0 0
  %625 = vmatpush1.bf16.msra.mxu0 0
  %626 = vmatprep.subr.bf16.mxu0 0
  %627 = vmatpush1.bf16.msra.mxu0 0
  %628 = vmatprep.subr.bf16.mxu0 0
  %629 = vmatpush1.bf16.msra.mxu0 0
  %630 = vmatprep.subr.bf16.mxu0 0
  %631 = vmatpush1.bf16.msra.mxu0 0
  %632 = vmatprep.subr.bf16.mxu0 0
  %633 = vmatpush1.bf16.msra.mxu0 0
  %634 = vmatprep.subr.bf16.mxu0 0
  %635 = vmatpush1.bf16.msra.mxu0 0
  %636 = vmatprep.subr.bf16.mxu0 0
  %637 = vmatpush1.bf16.msra.mxu0 0
  %638 = vmatprep.subr.bf16.mxu0 0
  %639 = vmatpush1.bf16.msra.mxu0 0
  %640 = vmatprep.mubr.bf16.mxu0 0
  %641 = vmatmul.mubr.bf16.gmra.mrb[0].mxu0 %v606
  %v642 = vpop.f32.mrb[0].mxu0
  %v643 = vadd.f32 0.0, %v642
  %v644 = vpop.f32.mrb[0].mxu0
  %v645 = vpop.f32.mrb[0].mxu0
  %v646 = vpop.f32.mrb[0].mxu0
  %647 = vdwg.mxu0
  %v648 = vadd.f32 %v600, %v643
  %v649 = vxor.u32 %v648, 2147483648
  %v650 = vmul.f32 %v649, 1.442695
  %v651 = vpow.pop %v650
  %v652 = vadd.f32 %v651, 1.0
  %v653 = vrcp.pop %v652
  %v654 = vmul.f32 1.0, %v653
  %v655 = vtanh.pop %v648
  %v656 = vmul.f32 %v654, %v593
  %658 = vrot.lane.b32.xlu0 %v655, 64
  %v659 = vpop.permute.xlu0 %658
  %v661 = vmul.f32 %v654, %v659
  %663 = vrot.lane.b32.xlu0 %v661, 32
  %v664 = vpop.permute.xlu0 %663
  %v666 = vadd.f32 %v656, %v664
  %v667 = vtanh.pop %v666
  %669 = vrot.lane.b32.xlu0 %v667, 64
  %v670 = vpop.permute.xlu0 %669
  %v672 = vmul.f32 %v654, %v670
  %v673 = vld [vmem:[#allocation2 + $0x38] sm:$0xff]
  %v674 = vpack.c.bf16 %v672, %v672
  %676 = vrot.lane.b32.xlu0 %v674, 32
  %v677 = vpop.permute.xlu0 %676
  %v679 = vsel %vm166, %v677, 0
  %681 = vmatprep.subr.bf16.mxu0 0
  %682 = vmatpush1.bf16.msra.mxu0 %v162
  %683 = vmatprep.subr.bf16.mxu0 0
  %684 = vmatpush1.bf16.msra.mxu0 %v163
  %685 = vmatprep.subr.bf16.mxu0 0
  %686 = vmatpush1.bf16.msra.mxu0 0
  %687 = vmatprep.subr.bf16.mxu0 0
  %688 = vmatpush1.bf16.msra.mxu0 0
  %689 = vmatprep.subr.bf16.mxu0 0
  %690 = vmatpush1.bf16.msra.mxu0 0
  %691 = vmatprep.subr.bf16.mxu0 0
  %692 = vmatpush1.bf16.msra.mxu0 0
  %693 = vmatprep.subr.bf16.mxu0 0
  %694 = vmatpush1.bf16.msra.mxu0 0
  %695 = vmatprep.subr.bf16.mxu0 0
  %696 = vmatpush1.bf16.msra.mxu0 0
  %697 = vmatprep.subr.bf16.mxu0 0
  %698 = vmatpush1.bf16.msra.mxu0 0
  %699 = vmatprep.subr.bf16.mxu0 0
  %700 = vmatpush1.bf16.msra.mxu0 0
  %701 = vmatprep.subr.bf16.mxu0 0
  %702 = vmatpush1.bf16.msra.mxu0 0
  %703 = vmatprep.subr.bf16.mxu0 0
  %704 = vmatpush1.bf16.msra.mxu0 0
  %705 = vmatprep.subr.bf16.mxu0 0
  %706 = vmatpush1.bf16.msra.mxu0 0
  %707 = vmatprep.subr.bf16.mxu0 0
  %708 = vmatpush1.bf16.msra.mxu0 0
  %709 = vmatprep.subr.bf16.mxu0 0
  %710 = vmatpush1.bf16.msra.mxu0 0
  %711 = vmatprep.subr.bf16.mxu0 0
  %712 = vmatpush1.bf16.msra.mxu0 0
  %713 = vmatprep.mubr.bf16.mxu0 0
  %714 = vmatmul.mubr.bf16.gmra.mrb[0].mxu0 %v679
  %v715 = vpop.f32.mrb[0].mxu0
  %v716 = vadd.f32 0.0, %v715
  %v717 = vpop.f32.mrb[0].mxu0
  %v718 = vpop.f32.mrb[0].mxu0
  %v719 = vpop.f32.mrb[0].mxu0
  %720 = vdwg.mxu0
  %v721 = vadd.f32 %v673, %v716
  %v722 = vxor.u32 %v721, 2147483648
  %v723 = vmul.f32 %v722, 1.442695
  %v724 = vpow.pop %v723
  %v725 = vadd.f32 %v724, 1.0
  %v726 = vrcp.pop %v725
  %v727 = vmul.f32 1.0, %v726
  %v728 = vtanh.pop %v721
  %v729 = vmul.f32 %v727, %v666
  %731 = vrot.lane.b32.xlu0 %v728, 64
  %v732 = vpop.permute.xlu0 %731
  %v734 = vmul.f32 %v727, %v732
  %736 = vrot.lane.b32.xlu0 %v734, 32
  %v737 = vpop.permute.xlu0 %736
  %v739 = vadd.f32 %v729, %v737
  %v740 = vtanh.pop %v739
  %742 = vrot.lane.b32.xlu0 %v740, 64
  %v743 = vpop.permute.xlu0 %742
  %v745 = vmul.f32 %v727, %v743
  %v746 = vpack.c.bf16 %v745, %v745
  %v747 = vld [vmem:[%s3] sm:$0xf]
  %v748 = vld [vmem:[%s3 + $0x4] sm:$0xf]
  %v749 = vld [vmem:[%s3 + $0x8] sm:$0xf]
  %v750 = vld [vmem:[%s3 + $0xc] sm:$0xf]
  %v751 = vld [vmem:[%s4] sm:$0x1]
  %v753 = vlaneseq
  %v754 = vshrl.u32 %v753, 7
  %v755 = vsub.s32 0, %v754
  %v756 = vrot.slane %v751, %v755
  %759 = vrot.lane.b32.xlu0 %v746, 32
  %v760 = vpop.permute.xlu0 %759
  %v765 = vunpack.c.l.b16 %v747
  %v766 = vunpack.c.l.b16 %v748
  %v767 = vunpack.c.l.b16 %v749
  %v768 = vunpack.c.l.b16 %v750
  %v769 = vpack.c.b16 %v766, %v765
  %v770 = vpack.c.b16 %v768, %v767
  %v774 = vsel %vm166, %v760, 0
  %776 = vmatprep.subr.bf16.mxu0 0
  %777 = vmatpush1.bf16.msra.mxu0 %v769
  %778 = vmatprep.subr.bf16.mxu0 0
  %779 = vmatpush1.bf16.msra.mxu0 %v770
  %780 = vmatprep.subr.bf16.mxu0 0
  %781 = vmatpush1.bf16.msra.mxu0 0
  %782 = vmatprep.subr.bf16.mxu0 0
  %783 = vmatpush1.bf16.msra.mxu0 0
  %784 = vmatprep.subr.bf16.mxu0 0
  %785 = vmatpush1.bf16.msra.mxu0 0
  %786 = vmatprep.subr.bf16.mxu0 0
  %787 = vmatpush1.bf16.msra.mxu0 0
  %788 = vmatprep.subr.bf16.mxu0 0
  %789 = vmatpush1.bf16.msra.mxu0 0
  %790 = vmatprep.subr.bf16.mxu0 0
  %791 = vmatpush1.bf16.msra.mxu0 0
  %792 = vmatprep.subr.bf16.mxu0 0
  %793 = vmatpush1.bf16.msra.mxu0 0
  %794 = vmatprep.subr.bf16.mxu0 0
  %795 = vmatpush1.bf16.msra.mxu0 0
  %796 = vmatprep.subr.bf16.mxu0 0
  %797 = vmatpush1.bf16.msra.mxu0 0
  %798 = vmatprep.subr.bf16.mxu0 0
  %799 = vmatpush1.bf16.msra.mxu0 0
  %800 = vmatprep.subr.bf16.mxu0 0
  %801 = vmatpush1.bf16.msra.mxu0 0
  %802 = vmatprep.subr.bf16.mxu0 0
  %803 = vmatpush1.bf16.msra.mxu0 0
  %804 = vmatprep.subr.bf16.mxu0 0
  %805 = vmatpush1.bf16.msra.mxu0 0
  %806 = vmatprep.subr.bf16.mxu0 0
  %807 = vmatpush1.bf16.msra.mxu0 0
  %808 = vmatprep.mubr.bf16.mxu0 0
  %809 = vmatmul.mubr.bf16.gmra.mrb[0].mxu0 %v774
  %v810 = vpop.f32.mrb[0].mxu0
  %v811 = vadd.f32 %v756, %v810
  %v812 = vpop.f32.mrb[0].mxu0
  %v813 = vpop.f32.mrb[0].mxu0
  %v814 = vpop.f32.mrb[0].mxu0
  %815 = vdwg.mxu0
  %v816 = vmax.f32 %v811, 0.0
  %v817 = vpack.c.bf16 %v816, %v816
  %v818 = vld [vmem:[%s5] sm:$0xf]
  %v819 = vld [vmem:[%s5 + $0x4] sm:$0xf]
  %v820 = vld [vmem:[%s5 + $0x8] sm:$0xf]
  %v821 = vld [vmem:[%s5 + $0xc] sm:$0xf]
  %v822 = vld [vmem:[%s5 + $0x10] sm:$0xf]
  %v823 = vld [vmem:[%s5 + $0x14] sm:$0xf]
  %v824 = vld [vmem:[%s5 + $0x18] sm:$0xf]
  %v825 = vld [vmem:[%s5 + $0x1c] sm:$0xf]
  %v826 = vld [vmem:[%s5 + $0x20] sm:$0xf]
  %v827 = vld [vmem:[%s5 + $0x24] sm:$0xf]
  %v828 = vld [vmem:[%s5 + $0x28] sm:$0xf]
  %v829 = vld [vmem:[%s5 + $0x2c] sm:$0xf]
  %v830 = vld [vmem:[%s5 + $0x30] sm:$0xf]
  %v831 = vld [vmem:[%s5 + $0x34] sm:$0xf]
  %v832 = vld [vmem:[%s5 + $0x38] sm:$0xf]
  %v833 = vld [vmem:[%s5 + $0x3c] sm:$0xf]
  %v834 = vld [vmem:[%s6] sm:$0x1]
  %v836 = vlaneseq
  %v837 = vshrl.u32 %v836, 7
  %v838 = vsub.s32 0, %v837
  %v839 = vrot.slane %v834, %v838
  %v857 = vunpack.c.l.b16 %v818
  %v858 = vunpack.c.l.b16 %v819
  %v859 = vunpack.c.l.b16 %v820
  %v860 = vunpack.c.l.b16 %v821
  %v861 = vunpack.c.l.b16 %v822
  %v862 = vunpack.c.l.b16 %v823
  %v863 = vunpack.c.l.b16 %v824
  %v864 = vunpack.c.l.b16 %v825
  %v865 = vunpack.c.l.b16 %v826
  %v866 = vunpack.c.l.b16 %v827
  %v867 = vunpack.c.l.b16 %v828
  %v868 = vunpack.c.l.b16 %v829
  %v869 = vunpack.c.l.b16 %v830
  %v870 = vunpack.c.l.b16 %v831
  %v871 = vunpack.c.l.b16 %v832
  %v872 = vunpack.c.l.b16 %v833
  %v873 = vpack.c.b16 %v858, %v857
  %v874 = vpack.c.b16 %v860, %v859
  %v875 = vpack.c.b16 %v862, %v861
  %v876 = vpack.c.b16 %v864, %v863
  %v877 = vpack.c.b16 %v866, %v865
  %v878 = vpack.c.b16 %v868, %v867
  %v879 = vpack.c.b16 %v870, %v869
  %v880 = vpack.c.b16 %v872, %v871
  %889 = vmatprep.subr.bf16.mxu0 0
  %890 = vmatpush1.bf16.msra.mxu0 %v873
  %891 = vmatprep.subr.bf16.mxu0 0
  %892 = vmatpush1.bf16.msra.mxu0 %v874
  %893 = vmatprep.subr.bf16.mxu0 0
  %894 = vmatpush1.bf16.msra.mxu0 %v875
  %895 = vmatprep.subr.bf16.mxu0 0
  %896 = vmatpush1.bf16.msra.mxu0 %v876
  %897 = vmatprep.subr.bf16.mxu0 0
  %898 = vmatpush1.bf16.msra.mxu0 %v877
  %899 = vmatprep.subr.bf16.mxu0 0
  %900 = vmatpush1.bf16.msra.mxu0 %v878
  %901 = vmatprep.subr.bf16.mxu0 0
  %902 = vmatpush1.bf16.msra.mxu0 %v879
  %903 = vmatprep.subr.bf16.mxu0 0
  %904 = vmatpush1.bf16.msra.mxu0 %v880
  %905 = vmatprep.subr.bf16.mxu0 0
  %906 = vmatpush1.bf16.msra.mxu0 0
  %907 = vmatprep.subr.bf16.mxu0 0
  %908 = vmatpush1.bf16.msra.mxu0 0
  %909 = vmatprep.subr.bf16.mxu0 0
  %910 = vmatpush1.bf16.msra.mxu0 0
  %911 = vmatprep.subr.bf16.mxu0 0
  %912 = vmatpush1.bf16.msra.mxu0 0
  %913 = vmatprep.subr.bf16.mxu0 0
  %914 = vmatpush1.bf16.msra.mxu0 0
  %915 = vmatprep.subr.bf16.mxu0 0
  %916 = vmatpush1.bf16.msra.mxu0 0
  %917 = vmatprep.subr.bf16.mxu0 0
  %918 = vmatpush1.bf16.msra.mxu0 0
  %919 = vmatprep.subr.bf16.mxu0 0
  %920 = vmatpush1.bf16.msra.mxu0 0
  %921 = vmatprep.mubr.bf16.mxu0 0
  %922 = vmatmul.mubr.bf16.gmra.mrb[0].mxu0 %v817
  %v923 = vpop.f32.mrb[0].mxu0
  %v924 = vadd.f32 %v839, %v923
  %v925 = vpop.f32.mrb[0].mxu0
  %v926 = vpop.f32.mrb[0].mxu0
  %v927 = vpop.f32.mrb[0].mxu0
  %928 = vdwg.mxu0
  %929 = vmax.xlane.f32.xlu0 %v924
  %v930 = vpop.xlane.xlu0 %929
  %v931 = vsub.f32 %v924, %v930
  %v932 = vmul.f32 %v931, 1.442695
  %v933 = vpow.pop %v932
  %934 = vadd.xlane.f32.xlu0 %v933
  %v935 = vpop.xlane.xlu0 %934
  %v936 = vrcp.pop %v935
  %v937 = vmul.f32 %v933, %v936
  %938 = vst [vmem:[%s7] sm:$0xff] %v937
  // Predicated region
  $region30: #{lstm_model_forward.1} parent=0 // pred_check
    _
  $region31: #{lstm_model_forward.1} parent=0 // pred_check_branch
    %940 = sbr.rel (0) target = $region33
  $region32: #{lstm_model_forward.1} parent=0 // pred_region
    _
  $region33: #{lstm_model_forward.1} parent=0 // pred_fallthru
    _
  // Predicated region
  $region34: #{lstm_model_forward.1} parent=0 // pred_check
    _
  $region35: #{lstm_model_forward.1} parent=0 // pred_check_branch
    %942 = sbr.rel (0) target = $region37
  $region36: #{lstm_model_forward.1} parent=0 // pred_region
    _
  $region37: #{lstm_model_forward.1} parent=0 // pred_fallthru
    _

</llo_original>
